<compile_context>
chip_gen: v7x
topology: tpu7x:2x2x1
jax: 0.10.0
libtpu: 0.0.40
codegen_flags: <defaults>
</compile_context>

<pallas_src>
import functools

import jax
import jax.numpy as jnp
from jax.experimental import pallas as pl
from jax.experimental.pallas import tpu as pltpu


LANE = 128
SUBLANE = 8


def _round_up(x, m):
    return ((x + m - 1) // m) * m


# ----------------------------------------------------------------------------
# Fused Pallas kernel: grid = (num_layers,), layer axis sequential
# ----------------------------------------------------------------------------
def fused_sage_kernel(a_ref, x_hbm_ref, w_ref, b_ref, p_ref, wo_ref, bo_ref,
                      o_ref, h_ref, x_sem, *, num_layers, num_classes):
    l = pl.program_id(0)
    hp = w_ref.shape[0] // 2          # fused weight is (2*hp, hp)

    # Load the input features into the persistent activation scratch once
    # (x lives in HBM via memory_space=pl.ANY; it never occupies VMEM after l=0).
    @pl.when(l == 0)
    def _init():
        dma = pltpu.make_async_copy(x_hbm_ref, h_ref, x_sem)
        dma.start()
        dma.wait()

    hv = h_ref[...]                                            # (NP, HP) bf16

    # Mean aggregation over neighbours: bf16 MXU operands, f32 accumulation.
    agg = jnp.dot(a_ref[...], hv, preferred_element_type=jnp.float32)

    # Root/neighbour transform as two tile-aligned dots (no concat temporary):
    #   out = agg @ W_l_pad + h @ W_r_pad + b
    out = jnp.dot(agg.astype(jnp.bfloat16), w_ref[:hp, :],
                  preferred_element_type=jnp.float32)
    out = out + jnp.dot(hv, w_ref[hp:, :],
                        preferred_element_type=jnp.float32)
    out = out + b_ref[...]                                     # (1, HP) f32 bcast
    out = jnp.maximum(out, 0.0)                                # ReLU every layer
    h_ref[...] = out.astype(jnp.bfloat16)

    # Head (global_mean_pool -> Linear -> log_softmax) on the last layer only.
    @pl.when(l == num_layers - 1)
    def _head():
        pooled = jnp.dot(p_ref[...], out.astype(jnp.bfloat16),
                         preferred_element_type=jnp.float32)   # (GP, HP) f32
        logits = jnp.dot(pooled.astype(jnp.bfloat16), wo_ref[...],
                         preferred_element_type=jnp.float32)   # (GP, CP) f32
        logits = logits + bo_ref[...]
        # Mask padded class lanes so they don't pollute the softmax.
        col = jax.lax.broadcasted_iota(jnp.int32, logits.shape, dimension=1)
        logits = jnp.where(col < num_classes, logits, -1e30)
        m = jnp.max(logits, axis=1, keepdims=True)
        shifted = logits - m
        lse = jnp.log(jnp.sum(jnp.exp(shifted), axis=1, keepdims=True))
        o_ref[...] = (shifted - lse).astype(o_ref.dtype)


# ----------------------------------------------------------------------------
# Glue: dense normalized adjacency & pooling matrices (plain JAX)
# ----------------------------------------------------------------------------
def build_norm_adjacency(edge_index, num_nodes):
    """A_norm[i, j] = (# edges j->i) / in_degree(i); zero rows for isolated nodes."""
    src = edge_index[0]
    dst = edge_index[1]
    adj = jnp.zeros((num_nodes, num_nodes), jnp.float32)
    adj = adj.at[dst, src].add(1.0)
    deg = jnp.sum(adj, axis=1, keepdims=True)
    return adj / jnp.maximum(deg, 1.0)


def build_pool_matrix(batch, num_graphs, num_nodes):
    """P[g, n] = 1/|graph g| if batch[n] == g else 0 (global_mean_pool)."""
    onehot = (batch[None, :] == jnp.arange(num_graphs)[:, None]).astype(jnp.float32)
    counts = jnp.sum(onehot, axis=1, keepdims=True)
    return onehot / jnp.maximum(counts, 1.0)


def _compute_vmem_limit(np_, hp, cp, gp):
    """Derive a generation-aware VMEM budget from the actual padded buffers."""
    a_b = np_ * np_ * 2                      # bf16 adjacency, single-buffered
    h_b = np_ * hp * 2                       # bf16 activation scratch
    w_b = 2 * (2 * hp * hp * 2)              # fused per-layer W, double-buffered
    bias_b = 2 * hp * 4                      # per-layer bias, double-buffered
    pool_b = gp * np_ * 2                    # pool matrix, single-buffered
    head_b = hp * cp * 2 + cp * 4            # head W / b
    out_b = 2 * gp * cp * 4                  # output block
    total = a_b + h_b + w_b + bias_b + pool_b + head_b + out_b
    budget = int(total * 1.5) + (8 << 20)    # headroom for compiler temporaries
    try:
        cap = int(getattr(pltpu.get_tpu_info(), "vmem_capacity_bytes", 64 << 20))
    except Exception:
        cap = 64 << 20                       # conservative (v7x per-TC VMEM)
    return max(16 << 20, min(budget, int(cap * 0.85)))


# ----------------------------------------------------------------------------
# Model: parameter init + forward
# ----------------------------------------------------------------------------
def init_params(key, in_channels, hidden_channels, out_channels):
    dims = [in_channels] + [hidden_channels] * 5
    params = {"sage": []}
    for i in range(5):
        key, k1, k2, k3 = jax.random.split(key, 4)
        f_in, f_out = dims[i], dims[i + 1]
        scale = 1.0 / jnp.sqrt(jnp.float32(f_in))
        params["sage"].append({
            "w_l": jax.random.uniform(k1, (f_in, f_out), jnp.float32, -scale, scale),
            "w_r": jax.random.uniform(k2, (f_in, f_out), jnp.float32, -scale, scale),
            "b": jax.random.uniform(k3, (1, f_out), jnp.float32, -scale, scale),
        })
    key, k1, k2 = jax.random.split(key, 3)
    scale = 1.0 / jnp.sqrt(jnp.float32(hidden_channels))
    params["out_w"] = jax.random.uniform(
        k1, (hidden_channels, out_channels), jnp.float32, -scale, scale)
    params["out_b"] = jax.random.uniform(
        k2, (1, out_channels), jnp.float32, -scale, scale)
    return params


def five_layer_sage_forward(params, x, edge_index, batch, num_graphs):
    n, f_in = x.shape
    hidden = params["sage"][0]["w_l"].shape[1]
    n_classes = params["out_w"].shape[1]
    num_layers = len(params["sage"])

    # Lane/sublane-aligned padded sizes.
    np_ = _round_up(max(n, LANE), LANE)                      # nodes
    hp = _round_up(max(hidden, f_in, LANE), LANE)            # common feature width
    cp = _round_up(max(n_classes, LANE), LANE)               # classes
    gp = _round_up(max(num_graphs, SUBLANE), SUBLANE)        # graphs

    # Dense degree-normalized adjacency, bf16 MXU operand (f32 accumulate).
    a = build_norm_adjacency(edge_index, n)
    a_pad = jnp.zeros((np_, np_), jnp.float32).at[:n, :n].set(a).astype(jnp.bfloat16)

    # Input features in HBM (bf16); copied into the activation scratch at l==0.
    x_pad = (jnp.zeros((np_, hp), jnp.float32).at[:n, :f_in].set(x)
             .astype(jnp.bfloat16))

    # Per-layer fused weights: W_cat = [[W_l], [W_r]] -> (L, 2*hp, hp), bf16.
    w_blocks, b_blocks = [], []
    for layer in params["sage"]:
        fi = layer["w_l"].shape[0]
        wl = jnp.zeros((hp, hp), jnp.float32).at[:fi, :hidden].set(layer["w_l"])
        wr = jnp.zeros((hp, hp), jnp.float32).at[:fi, :hidden].set(layer["w_r"])
        w_blocks.append(jnp.concatenate([wl, wr], axis=0).astype(jnp.bfloat16))
        b_blocks.append(jnp.zeros((1, hp), jnp.float32).at[:, :hidden].set(layer["b"]))
    w_all = jnp.stack(w_blocks, axis=0)                      # (L, 2*hp, hp) bf16
    b_all = jnp.stack(b_blocks, axis=0)                      # (L, 1, hp) f32

    pool = build_pool_matrix(batch, num_graphs, n)
    p_pad = (jnp.zeros((gp, np_), jnp.float32).at[:num_graphs, :n].set(pool)
             .astype(jnp.bfloat16))

    wo_pad = (jnp.zeros((hp, cp), jnp.float32)
              .at[:hidden, :n_classes].set(params["out_w"]).astype(jnp.bfloat16))
    bo_pad = jnp.zeros((1, cp), jnp.float32).at[:, :n_classes].set(params["out_b"])

    kernel = functools.partial(fused_sage_kernel,
                               num_layers=num_layers, num_classes=n_classes)

    vmem_limit = _compute_vmem_limit(np_, hp, cp, gp)

    out_padded = pl.pallas_call(
        kernel,
        out_shape=jax.ShapeDtypeStruct((gp, cp), jnp.float32),
        grid_spec=pltpu.PrefetchScalarGridSpec(
            num_scalar_prefetch=0,
            grid=(num_layers,),
            in_specs=[
                # A: VMEM-resident, single-buffered (constant block index).
                pl.BlockSpec((np_, np_), lambda l: (0, 0),
                             pipeline_mode=pl.Buffered(1)),
                # X: raw HBM ref, DMA'd into the scratch once at l == 0.
                pl.BlockSpec(memory_space=pl.ANY),
                # Per-layer fused W / b: streamed (default double-buffered).
                pl.BlockSpec((None, 2 * hp, hp), lambda l: (l, 0, 0)),
                pl.BlockSpec((None, 1, hp), lambda l: (l, 0, 0)),
                # Pool matrix / head weights: resident, single-buffered.
                pl.BlockSpec((gp, np_), lambda l: (0, 0),
                             pipeline_mode=pl.Buffered(1)),
                pl.BlockSpec((hp, cp), lambda l: (0, 0),
                             pipeline_mode=pl.Buffered(1)),
                pl.BlockSpec((1, cp), lambda l: (0, 0),
                             pipeline_mode=pl.Buffered(1)),
            ],
            out_specs=pl.BlockSpec((gp, cp), lambda l: (0, 0)),
            scratch_shapes=[
                pltpu.VMEM((np_, hp), jnp.bfloat16),      # persistent activations
                pltpu.SemaphoreType.DMA(()),              # x -> scratch copy sem
            ],
        ),
        compiler_params=pltpu.CompilerParams(
            dimension_semantics=("arbitrary",),        # layer axis is sequential
            vmem_limit_bytes=vmem_limit,
        ),
    )(a_pad, x_pad, w_all, b_all, p_pad, wo_pad, bo_pad)

    return out_padded[:num_graphs, :n_classes]


# ----------------------------------------------------------------------------
# Main
# ----------------------------------------------------------------------------
if __name__ == "__main__":
    in_channels, hidden_channels, out_channels = 4, 32, 8
    num_nodes, num_edges, num_graphs = 16, 48, 2

    key = jax.random.PRNGKey(0)
    key, kx, ke, kp = jax.random.split(key, 4)

    x = jax.random.normal(kx, (num_nodes, in_channels), jnp.float32)
    edge_index = jax.random.randint(ke, (2, num_edges), 0, num_nodes, jnp.int32)
    # batch assignment: first half of nodes -> graph 0, rest -> graph 1
    batch = jnp.concatenate([
        jnp.zeros((num_nodes // 2,), jnp.int32),
        jnp.ones((num_nodes - num_nodes // 2,), jnp.int32),
    ])

    params = init_params(kp, in_channels, hidden_channels, out_channels)

    out = five_layer_sage_forward(params, x, edge_index, batch, num_graphs)
    out = jax.block_until_ready(out)

    assert out.shape == (num_graphs, out_channels)
    assert bool(jnp.all(jnp.isfinite(out)))
    # rows of log_softmax must sum (in prob space) to ~1
    assert bool(jnp.allclose(jnp.sum(jnp.exp(out), axis=1), 1.0, atol=1e-4))

    print("KERNEL_OK")
</pallas_src>

<mosaic_0001>
module attributes {stable_mosaic.version = 11 : i64} {
  func.func @fused_sage_kernel(%arg0: i32, %arg1: memref<128x128xbf16, #tpu.memory_space<vmem>>, %arg2: memref<128x128xbf16, #tpu.memory_space<any>>, %arg3: memref<1x256x128xbf16, #tpu.memory_space<vmem>>, %arg4: memref<1x1x128xf32, #tpu.memory_space<vmem>>, %arg5: memref<8x128xbf16, #tpu.memory_space<vmem>>, %arg6: memref<128x128xbf16, #tpu.memory_space<vmem>>, %arg7: memref<1x128xf32, #tpu.memory_space<vmem>>, %arg8: memref<8x128xf32, #tpu.memory_space<vmem>>, %arg9: memref<128x128xbf16, #tpu.memory_space<vmem>>, %arg10: memref<!tpu.dma_semaphore, #tpu.memory_space<semaphore_mem>>) attributes {dimension_semantics = [#tpu.dimension_semantics<arbitrary>], iteration_bounds = array<i64: 5>, scalar_prefetch = 0 : i64, scratch_operands = 2 : i64, tpu.core_type = #tpu.core_type<tc>, window_params = [{pipeline_mode = #tpu.pipeline_mode<synchronous>, transform_indices = @transform_0, window_bounds = array<i64: 128, 128>}, {}, {transform_indices = @transform_2, window_bounds = array<i64: 1, 256, 128>}, {transform_indices = @transform_3, window_bounds = array<i64: 1, 1, 128>}, {pipeline_mode = #tpu.pipeline_mode<synchronous>, transform_indices = @transform_4, window_bounds = array<i64: 8, 128>}, {pipeline_mode = #tpu.pipeline_mode<synchronous>, transform_indices = @transform_5, window_bounds = array<i64: 128, 128>}, {pipeline_mode = #tpu.pipeline_mode<synchronous>, transform_indices = @transform_6, window_bounds = array<i64: 1, 128>}, {pipeline_mode = #tpu.pipeline_mode<synchronous>, transform_indices = @transform_7, window_bounds = array<i64: 8, 128>}]} {
    %c0_i32 = arith.constant 0 : i32
    %0 = arith.cmpi eq, %arg0, %c0_i32 : i32
    %1 = arith.extui %0 : i1 to i32
    %c0_i32_0 = arith.constant 0 : i32
    %2 = arith.cmpi ne, %1, %c0_i32_0 : i32
    scf.if %2 {
      tpu.enqueue_dma source(%arg2 : memref<128x128xbf16, #tpu.memory_space<any>>) target(%arg9 : memref<128x128xbf16, #tpu.memory_space<vmem>>) target_semaphore(%arg10 : memref<!tpu.dma_semaphore, #tpu.memory_space<semaphore_mem>>)
      tpu.wait_dma2 semaphore(%arg10 : memref<!tpu.dma_semaphore, #tpu.memory_space<semaphore_mem>>) src(%arg2 : memref<128x128xbf16, #tpu.memory_space<any>>) dst(%arg9 : memref<128x128xbf16, #tpu.memory_space<vmem>>)
    } else {
    }
    %c0 = arith.constant 0 : index
    %c0_1 = arith.constant 0 : index
    %3 = vector.load %arg9[%c0, %c0_1] : memref<128x128xbf16, #tpu.memory_space<vmem>>, vector<128x128xbf16>
    %c0_2 = arith.constant 0 : index
    %c0_3 = arith.constant 0 : index
    %4 = vector.load %arg1[%c0_2, %c0_3] : memref<128x128xbf16, #tpu.memory_space<vmem>>, vector<128x128xbf16>
    %cst = arith.constant dense<0.000000e+00> : vector<128x128xf32>
    %5 = tpu.matmul %4, %3, %cst {dimension_numbers = #tpu.dot_dimension_numbers<[1], [0], [0], [1], [0, 0, 1, 1], [], []>} : vector<128x128xbf16>, vector<128x128xbf16>, vector<128x128xf32> -> vector<128x128xf32>
    %6 = arith.truncf %5 : vector<128x128xf32> to vector<128x128xbf16>
    %c0_4 = arith.constant 0 : index
    %c0_5 = arith.constant 0 : index
    %c0_6 = arith.constant 0 : index
    %7 = vector.load %arg3[%c0_4, %c0_5, %c0_6] : memref<1x256x128xbf16, #tpu.memory_space<vmem>>, vector<1x128x128xbf16>
    %8 = vector.shape_cast %7 : vector<1x128x128xbf16> to vector<128x128xbf16>
    %cst_7 = arith.constant dense<0.000000e+00> : vector<128x128xf32>
    %9 = tpu.matmul %6, %8, %cst_7 {dimension_numbers = #tpu.dot_dimension_numbers<[1], [0], [0], [1], [0, 0, 1, 1], [], []>} : vector<128x128xbf16>, vector<128x128xbf16>, vector<128x128xf32> -> vector<128x128xf32>
    %c0_8 = arith.constant 0 : index
    %c128 = arith.constant 128 : index
    %c0_9 = arith.constant 0 : index
    %10 = vector.load %arg3[%c0_8, %c128, %c0_9] : memref<1x256x128xbf16, #tpu.memory_space<vmem>>, vector<1x128x128xbf16>
    %11 = vector.shape_cast %10 : vector<1x128x128xbf16> to vector<128x128xbf16>
    %cst_10 = arith.constant dense<0.000000e+00> : vector<128x128xf32>
    %12 = tpu.matmul %3, %11, %cst_10 {dimension_numbers = #tpu.dot_dimension_numbers<[1], [0], [0], [1], [0, 0, 1, 1], [], []>} : vector<128x128xbf16>, vector<128x128xbf16>, vector<128x128xf32> -> vector<128x128xf32>
    %13 = arith.addf %9, %12 : vector<128x128xf32>
    %c0_11 = arith.constant 0 : index
    %c0_12 = arith.constant 0 : index
    %c0_13 = arith.constant 0 : index
    %14 = vector.load %arg4[%c0_11, %c0_12, %c0_13] : memref<1x1x128xf32, #tpu.memory_space<vmem>>, vector<1x1x128xf32>
    %15 = vector.shape_cast %14 : vector<1x1x128xf32> to vector<1x128xf32>
    %16 = vector.broadcast %15 : vector<1x128xf32> to vector<128x128xf32>
    %17 = arith.addf %13, %16 : vector<128x128xf32>
    %cst_14 = arith.constant 0.000000e+00 : f32
    %18 = vector.broadcast %cst_14 : f32 to vector<128x128xf32>
    %19 = arith.maximumf %17, %18 : vector<128x128xf32>
    %20 = arith.truncf %19 : vector<128x128xf32> to vector<128x128xbf16>
    %c0_15 = arith.constant 0 : index
    %c0_16 = arith.constant 0 : index
    %21 = vector.load %arg9[%c0_15, %c0_16] : memref<128x128xbf16, #tpu.memory_space<vmem>>, vector<128x128xbf16>
    tpu.vector_store %arg9[%c0_15, %c0_16], %20 {strides = array<i32>} : memref<128x128xbf16, #tpu.memory_space<vmem>>, vector<128x128xbf16>,
    %c4_i32 = arith.constant 4 : i32
    %22 = arith.cmpi eq, %arg0, %c4_i32 : i32
    %23 = arith.extui %22 : i1 to i32
    %c0_i32_17 = arith.constant 0 : i32
    %24 = arith.cmpi ne, %23, %c0_i32_17 : i32
    scf.if %24 {
      %c0_18 = arith.constant 0 : index
      %c0_19 = arith.constant 0 : index
      %25 = vector.load %arg5[%c0_18, %c0_19] : memref<8x128xbf16, #tpu.memory_space<vmem>>, vector<8x128xbf16>
      %26 = arith.truncf %19 : vector<128x128xf32> to vector<128x128xbf16>
      %cst_20 = arith.constant dense<0.000000e+00> : vector<8x128xf32>
      %27 = tpu.matmul %25, %26, %cst_20 {dimension_numbers = #tpu.dot_dimension_numbers<[1], [0], [0], [1], [0, 0, 1, 1], [], []>} : vector<8x128xbf16>, vector<128x128xbf16>, vector<8x128xf32> -> vector<8x128xf32>
      %28 = arith.truncf %27 : vector<8x128xf32> to vector<8x128xbf16>
      %c0_21 = arith.constant 0 : index
      %c0_22 = arith.constant 0 : index
      %29 = vector.load %arg6[%c0_21, %c0_22] : memref<128x128xbf16, #tpu.memory_space<vmem>>, vector<128x128xbf16>
      %cst_23 = arith.constant dense<0.000000e+00> : vector<8x128xf32>
      %30 = tpu.matmul %28, %29, %cst_23 {dimension_numbers = #tpu.dot_dimension_numbers<[1], [0], [0], [1], [0, 0, 1, 1], [], []>} : vector<8x128xbf16>, vector<128x128xbf16>, vector<8x128xf32> -> vector<8x128xf32>
      %c0_24 = arith.constant 0 : index
      %c0_25 = arith.constant 0 : index
      %31 = vector.load %arg7[%c0_24, %c0_25] : memref<1x128xf32, #tpu.memory_space<vmem>>, vector<1x128xf32>
      %32 = vector.broadcast %31 : vector<1x128xf32> to vector<8x128xf32>
      %33 = arith.addf %30, %32 : vector<8x128xf32>
      %34 = tpu.iota {dimensions = array<i32: 1>} : vector<8x128xi32>
      %c8_i32 = arith.constant 8 : i32
      %35 = vector.broadcast %c8_i32 : i32 to vector<8x128xi32>
      %36 = arith.cmpi slt, %34, %35 : vector<8x128xi32>
      %cst_26 = arith.constant -1.000000e+30 : f32
      %37 = vector.broadcast %cst_26 : f32 to vector<8x128xf32>
      %38 = arith.select %36, %33, %37 : vector<8x128xi1>, vector<8x128xf32>
      %cst_27 = arith.constant dense<0xFF800000> : vector<8xf32>
      %39 = vector.multi_reduction <maximumf>, %38, %cst_27 [1] : vector<8x128xf32> to vector<8xf32>
      %40 = vector.shape_cast %39 : vector<8xf32> to vector<8x1xf32>
      %41 = vector.broadcast %40 : vector<8x1xf32> to vector<8x128xf32>
      %42 = arith.subf %38, %41 : vector<8x128xf32>
      %43 = math.exp %42 : vector<8x128xf32>
      %cst_28 = arith.constant dense<0.000000e+00> : vector<8xf32>
      %44 = vector.multi_reduction <add>, %43, %cst_28 [1] : vector<8x128xf32> to vector<8xf32>
      %45 = vector.shape_cast %44 : vector<8xf32> to vector<8x1xf32>
      %46 = math.log %45 : vector<8x1xf32>
      %47 = vector.broadcast %46 : vector<8x1xf32> to vector<8x128xf32>
      %48 = arith.subf %42, %47 : vector<8x128xf32>
      %c0_29 = arith.constant 0 : index
      %c0_30 = arith.constant 0 : index
      %49 = vector.load %arg8[%c0_29, %c0_30] : memref<8x128xf32, #tpu.memory_space<vmem>>, vector<8x128xf32>
      tpu.vector_store %arg8[%c0_29, %c0_30], %48 {strides = array<i32>} : memref<8x128xf32, #tpu.memory_space<vmem>>, vector<8x128xf32>,
    } else {
    }
    return
  }
  func.func @transform_0(%arg0: i32) -> (i32, i32) {
    %c0_i32 = arith.constant 0 : i32
    %c0_i32_0 = arith.constant 0 : i32
    %c0_i32_1 = arith.constant 0 : i32
    return %c0_i32, %c0_i32_0 : i32, i32
  }
  func.func @transform_2(%arg0: i32) -> (i32, i32, i32) {
    %c0_i32 = arith.constant 0 : i32
    %c0_i32_0 = arith.constant 0 : i32
    %c0_i32_1 = arith.constant 0 : i32
    return %arg0, %c0_i32, %c0_i32_0 : i32, i32, i32
  }
  func.func @transform_3(%arg0: i32) -> (i32, i32, i32) {
    %c0_i32 = arith.constant 0 : i32
    %c0_i32_0 = arith.constant 0 : i32
    %c0_i32_1 = arith.constant 0 : i32
    return %arg0, %c0_i32, %c0_i32_0 : i32, i32, i32
  }
  func.func @transform_4(%arg0: i32) -> (i32, i32) {
    %c0_i32 = arith.constant 0 : i32
    %c0_i32_0 = arith.constant 0 : i32
    %c0_i32_1 = arith.constant 0 : i32
    return %c0_i32, %c0_i32_0 : i32, i32
  }
  func.func @transform_5(%arg0: i32) -> (i32, i32) {
    %c0_i32 = arith.constant 0 : i32
    %c0_i32_0 = arith.constant 0 : i32
    %c0_i32_1 = arith.constant 0 : i32
    return %c0_i32, %c0_i32_0 : i32, i32
  }
  func.func @transform_6(%arg0: i32) -> (i32, i32) {
    %c0_i32 = arith.constant 0 : i32
    %c0_i32_0 = arith.constant 0 : i32
    %c0_i32_1 = arith.constant 0 : i32
    return %c0_i32, %c0_i32_0 : i32, i32
  }
  func.func @transform_7(%arg0: i32) -> (i32, i32) {
    %c0_i32 = arith.constant 0 : i32
    %c0_i32_0 = arith.constant 0 : i32
    %c0_i32_1 = arith.constant 0 : i32
    return %c0_i32, %c0_i32_0 : i32, i32
  }
}

</mosaic_0001>

<llo_original>
// kernel: tpu_custom_call.1
$region0: #{tpu_custom_call.1}
  #allocation0 [shape = 'u32[]', space=smem, size = 0x4, offset = 0x4, fixed_abs, tag = 'smem constant byte address 0x4 - core index']
  #allocation1 [shape = 'u32[144,128]{1,0:T(1,128)}', space=vmem, size = 0x12000, scoped, tag = 'internal scratch']
  #allocation2 [shape = 'bf16[128,128]{1,0:T(16,128)(2,1)}', space=vmem, size = 0x8000, scoped, tag = 'scratch operand']
  #allocation3 [shape = 's32[1]{0}', space=sflag, size = 0x4, scoped, tag = 'scratch operand']
  #allocation11 [shape = 's32[]', space=sflag, size = 0x4, offset = 0, fixed_abs, tag = 'sflag constant byte address 0x0 - dummy sync flag']
  #allocation12 [shape = 's32[]', space=sflag, size = 0x4, offset = 0, fixed_abs, tag = 'sflag constant byte address 0x0 - dummy sync flag']
  #allocation13 [shape = 'u32[]', space=smem, size = 0x4, offset = 0x44, fixed_abs, tag = 'smem constant byte address 0x44 - assertion arg 0']
  #allocation14 [shape = 'u32[]', space=smem, size = 0x4, offset = 0x48, fixed_abs, tag = 'smem constant byte address 0x48 - assertion arg 1']
  %s0 = inlined_call_operand.hbm [shape: bf16[128,128], index: 0, kind: input, shape index: {}]
  %s1 = inlined_call_operand.hbm [shape: bf16[128,128], index: 1, kind: input, shape index: {}]
  %s2 = inlined_call_operand.hbm [shape: bf16[5,256,128], index: 2, kind: input, shape index: {}]
  %s3 = inlined_call_operand.vmem [shape: f32[5,1,128], index: 3, kind: input, shape index: {}]
  %s4 = inlined_call_operand.vmem [shape: bf16[8,128], index: 4, kind: input, shape index: {}]
  %s5 = inlined_call_operand.hbm [shape: bf16[128,128], index: 5, kind: input, shape index: {}]
  %s6 = inlined_call_operand.vmem [shape: f32[1,128], index: 6, kind: input, shape index: {}]
  %s7 = inlined_call_operand.hbm [shape: f32[8,128], index: 7, kind: output, shape index: {}]
  %s8 = sld [smem:[#allocation0]]
  $region81: #{tpu_custom_call.1} parent=0
    _
  %s10 = ssub.s32 1, %s8
  %s11 = scalar_select 0, %s10, %s8
  $region1: #{tpu_custom_call.1} parent=0
    #allocation4 [shape = 'u8[32768]{0}', space=vmem, size = 0x8000, scoped, tag = 'input window, operand 0, single buffered']
    #allocation5 [shape = 's32[2]{0}', space=sflag, size = 0x8, scoped, tag = 'scoped memory for tpu_custom_call.1']
    #allocation6 [shape = 's32[2]{0}', space=sflag, size = 0x8, scoped, tag = 'scoped memory for tpu_custom_call.1']
    #allocation7 [shape = 'u8[131072]{0}', space=vmem, size = 0x20000, scoped, tag = 'input window, operand 2']
    #allocation8 [shape = 's32[2]{0}', space=sflag, size = 0x8, scoped, tag = 'scoped memory for tpu_custom_call.1']
    #allocation9 [shape = 'u8[32768]{0}', space=vmem, size = 0x8000, scoped, tag = 'input window, operand 5, single buffered']
    #allocation10 [shape = 'u8[4096]{0}', space=vmem, size = 0x1000, scoped, tag = 'output window, operand 0, single buffered']
    %12 = vsyncpa [#allocation5], 0
    %13 = vsyncpa [#allocation8], 0
    %s14 = scalar_lea.sflag [#allocation8], 1
    %15 = vsyncpa %s14, 0
    %16 = vsyncpa [#allocation6], 0
    loop: start=0, step=1, limit=7
    $region2: #{tpu_custom_call.1} parent=1 // loop_pre_header
      _
    $region3: #{tpu_custom_call.1} parent=1 // loop_header
      %s18 = sphi 0, %s22
      %p19 = scmp.ge.s32.totalorder %s18, 7
      %s26 = sphi 0, %s26
      %s28 = sphi 0, %s26
      %s29 = sphi 0, %s28
      %s43 = sphi 0, %s29
      %s49 = sphi 0, %s51
      %s52 = sphi 0, %s49
      %s53 = sphi 0, %s52
      %s69 = sphi 0, %s53
      %s75 = sphi 0, %s77
      %s78 = sphi 0, %s75
      %s79 = sphi 0, %s78
      %s95 = sphi 0, %s79
      %s99 = sphi 0, %s99
      %s101 = sphi 0, %s99
      %s102 = sphi 0, %s101
      %s116 = sphi 0, %s102
      %s120 = sphi 0, %s120
      %s122 = sphi 0, %s120
      %s123 = sphi 0, %s122
      %s137 = sphi 0, %s123
      %s141 = sphi 0, %s141
      %s143 = sphi 0, %s141
      %s144 = sphi 0, %s143
      %s158 = sphi 0, %s144
      %s162 = sphi 0, %s162
      %s164 = sphi 0, %s162
      %s165 = sphi 0, %s164
      %s179 = sphi 0, %s165
    $region4: #{tpu_custom_call.1} parent=1 // loop_header_branch
      %21 = sbr.rel (%p19) target = $region8
    $region5: #{tpu_custom_call.1} parent=1 // loop_body
      %s23 = ssub.s32 %s18, 1
      %s24 = ssub.s32 %s18, 2
      %s25 = sadd.s32 %s18, 1
      %s27 = sadd.s32 %s26, 1
      %p30 = scmp.eq.s32.totalorder %s18, 4
      %p31 = scmp.ne.s32.totalorder %s26, %s28
      %p32 = scmp.eq.s32.totalorder %s18, 0
      %p33 = por %p31, %p32
      %p34 = scmp.ne.s32.totalorder %s26, %s28
      %p35 = scmp.eq.s32.totalorder %s23, 4
      %p36 = por %p34, %p35
      %p37 = scmp.ne.s32.totalorder %s28, %s29
      %p38 = scmp.eq.s32.totalorder %s23, 0
      %p39 = por %p37, %p38
      %p40 = scmp.ne.s32.totalorder %s28, %s29
      %p41 = scmp.eq.s32.totalorder %s24, 4
      %p42 = por %p40, %p41
      %p44 = scmp.ne.s32.totalorder %s29, %s43
      %p45 = scmp.eq.s32.totalorder %s24, 0
      %p46 = por %p44, %p45
      %s47 = ssub.s32 %s18, %s25
      %p48 = scmp.eq.s32.totalorder %s47, 0
      %s50 = sadd.s32 %s49, 1
      %s51 = scalar_select %p48, %s49, %s50
      %p54 = pneg %p48
      %p55 = scmp.eq.s32.totalorder %s18, 4
      %p56 = por %p54, %p55
      %p57 = scmp.ne.s32.totalorder %s49, %s52
      %p58 = scmp.eq.s32.totalorder %s18, 0
      %p59 = por %p57, %p58
      %p60 = scmp.ne.s32.totalorder %s49, %s52
      %p61 = scmp.eq.s32.totalorder %s23, 4
      %p62 = por %p60, %p61
      %p63 = scmp.ne.s32.totalorder %s52, %s53
      %p64 = scmp.eq.s32.totalorder %s23, 0
      %p65 = por %p63, %p64
      %p66 = scmp.ne.s32.totalorder %s52, %s53
      %p67 = scmp.eq.s32.totalorder %s24, 4
      %p68 = por %p66, %p67
      %p70 = scmp.ne.s32.totalorder %s53, %s69
      %p71 = scmp.eq.s32.totalorder %s24, 0
      %p72 = por %p70, %p71
      %s73 = ssub.s32 %s18, %s25
      %p74 = scmp.eq.s32.totalorder %s73, 0
      %s76 = sadd.s32 %s75, 1
      %s77 = scalar_select %p74, %s75, %s76
      %p80 = pneg %p74
      %p81 = scmp.eq.s32.totalorder %s18, 4
      %p82 = por %p80, %p81
      %p83 = scmp.ne.s32.totalorder %s75, %s78
      %p84 = scmp.eq.s32.totalorder %s18, 0
      %p85 = por %p83, %p84
      %p86 = scmp.ne.s32.totalorder %s75, %s78
      %p87 = scmp.eq.s32.totalorder %s23, 4
      %p88 = por %p86, %p87
      %p89 = scmp.ne.s32.totalorder %s78, %s79
      %p90 = scmp.eq.s32.totalorder %s23, 0
      %p91 = por %p89, %p90
      %p92 = scmp.ne.s32.totalorder %s78, %s79
      %p93 = scmp.eq.s32.totalorder %s24, 4
      %p94 = por %p92, %p93
      %p96 = scmp.ne.s32.totalorder %s79, %s95
      %p97 = scmp.eq.s32.totalorder %s24, 0
      %p98 = por %p96, %p97
      %s100 = sadd.s32 %s99, 1
      %p103 = scmp.eq.s32.totalorder %s18, 4
      %p104 = scmp.ne.s32.totalorder %s99, %s101
      %p105 = scmp.eq.s32.totalorder %s18, 0
      %p106 = por %p104, %p105
      %p107 = scmp.ne.s32.totalorder %s99, %s101
      %p108 = scmp.eq.s32.totalorder %s23, 4
      %p109 = por %p107, %p108
      %p110 = scmp.ne.s32.totalorder %s101, %s102
      %p111 = scmp.eq.s32.totalorder %s23, 0
      %p112 = por %p110, %p111
      %p113 = scmp.ne.s32.totalorder %s101, %s102
      %p114 = scmp.eq.s32.totalorder %s24, 4
      %p115 = por %p113, %p114
      %p117 = scmp.ne.s32.totalorder %s102, %s116
      %p118 = scmp.eq.s32.totalorder %s24, 0
      %p119 = por %p117, %p118
      %s121 = sadd.s32 %s120, 1
      %p124 = scmp.eq.s32.totalorder %s18, 4
      %p125 = scmp.ne.s32.totalorder %s120, %s122
      %p126 = scmp.eq.s32.totalorder %s18, 0
      %p127 = por %p125, %p126
      %p128 = scmp.ne.s32.totalorder %s120, %s122
      %p129 = scmp.eq.s32.totalorder %s23, 4
      %p130 = por %p128, %p129
      %p131 = scmp.ne.s32.totalorder %s122, %s123
      %p132 = scmp.eq.s32.totalorder %s23, 0
      %p133 = por %p131, %p132
      %p134 = scmp.ne.s32.totalorder %s122, %s123
      %p135 = scmp.eq.s32.totalorder %s24, 4
      %p136 = por %p134, %p135
      %p138 = scmp.ne.s32.totalorder %s123, %s137
      %p139 = scmp.eq.s32.totalorder %s24, 0
      %p140 = por %p138, %p139
      %s142 = sadd.s32 %s141, 1
      %p145 = scmp.eq.s32.totalorder %s18, 4
      %p146 = scmp.ne.s32.totalorder %s141, %s143
      %p147 = scmp.eq.s32.totalorder %s18, 0
      %p148 = por %p146, %p147
      %p149 = scmp.ne.s32.totalorder %s141, %s143
      %p150 = scmp.eq.s32.totalorder %s23, 4
      %p151 = por %p149, %p150
      %p152 = scmp.ne.s32.totalorder %s143, %s144
      %p153 = scmp.eq.s32.totalorder %s23, 0
      %p154 = por %p152, %p153
      %p155 = scmp.ne.s32.totalorder %s143, %s144
      %p156 = scmp.eq.s32.totalorder %s24, 4
      %p157 = por %p155, %p156
      %p159 = scmp.ne.s32.totalorder %s144, %s158
      %p160 = scmp.eq.s32.totalorder %s24, 0
      %p161 = por %p159, %p160
      %s163 = sadd.s32 %s162, 1
      %p166 = scmp.eq.s32.totalorder %s18, 4
      %p167 = scmp.ne.s32.totalorder %s162, %s164
      %p168 = scmp.eq.s32.totalorder %s18, 0
      %p169 = por %p167, %p168
      %p170 = scmp.ne.s32.totalorder %s162, %s164
      %p171 = scmp.eq.s32.totalorder %s23, 4
      %p172 = por %p170, %p171
      %p173 = scmp.ne.s32.totalorder %s164, %s165
      %p174 = scmp.eq.s32.totalorder %s23, 0
      %p175 = por %p173, %p174
      %p176 = scmp.ne.s32.totalorder %s164, %s165
      %p177 = scmp.eq.s32.totalorder %s24, 4
      %p178 = por %p176, %p177
      %p180 = scmp.ne.s32.totalorder %s165, %s179
      %p181 = scmp.eq.s32.totalorder %s24, 0
      %p182 = por %p180, %p181
      %p183 = scmp.le.s32.totalorder 1, %s18
      %p184 = scmp.lt.s32.totalorder %s18, 6
      %p185 = pnand %p183, %p184
      %p186 = pneg %p185
      // Predicated region
      $region9: #{tpu_custom_call.1} parent=5 // pred_check
        _
      $region10: #{tpu_custom_call.1} parent=5 // pred_check_branch
        %188 = sbr.rel (%p185) target = $region12
      $region11: #{tpu_custom_call.1} parent=5 // pred_region
        %s189 = ssub.s32 %s18, 1
        // Predicated region
        $region13: #{tpu_custom_call.1} parent=11 // pred_check
          %p190 = pneg %p39
        $region14: #{tpu_custom_call.1} parent=11 // pred_check_branch
          %192 = sbr.rel (%p190) target = $region16
        $region15: #{tpu_custom_call.1} parent=11 // pred_region
          %s194 = ssub.s32 1024, 1024
          %195 = vsyncadd [#allocation5], %s194
          %s196 = sshll.u32 [#allocation4], 4
          %s197 = int_to_ptr.vmem [resolvable:$true] %s196
          %202 = dma.hbm_to_vmem [thread:$0]  %s0, 1024, %s197, [#allocation5], 64, 64, 4
        $region16: #{tpu_custom_call.1} parent=11 // pred_fallthru
          _
        // Predicated region
        $region17: #{tpu_custom_call.1} parent=11 // pred_check
          %p203 = pneg %p112
        $region18: #{tpu_custom_call.1} parent=11 // pred_check_branch
          %205 = sbr.rel (%p203) target = $region20
        $region19: #{tpu_custom_call.1} parent=11 // pred_region
          _
        $region20: #{tpu_custom_call.1} parent=11 // pred_fallthru
          _
        // Predicated region
        $region21: #{tpu_custom_call.1} parent=11 // pred_check
          %p206 = pneg %p133
        $region22: #{tpu_custom_call.1} parent=11 // pred_check_branch
          %208 = sbr.rel (%p206) target = $region24
        $region23: #{tpu_custom_call.1} parent=11 // pred_region
          %s210 = ssub.s32 1024, 1024
          %211 = vsyncadd [#allocation8], %s210
          %s212 = sshll.u32 [#allocation9], 4
          %s213 = int_to_ptr.vmem [resolvable:$true] %s212
          %218 = dma.hbm_to_vmem [thread:$0]  %s5, 1024, %s213, [#allocation8], 64, 64, 4
        $region24: #{tpu_custom_call.1} parent=11 // pred_fallthru
          _
        // Predicated region
        $region25: #{tpu_custom_call.1} parent=11 // pred_check
          %p219 = pneg %p154
        $region26: #{tpu_custom_call.1} parent=11 // pred_check_branch
          %221 = sbr.rel (%p219) target = $region28
        $region27: #{tpu_custom_call.1} parent=11 // pred_region
          _
        $region28: #{tpu_custom_call.1} parent=11 // pred_fallthru
          _
      $region12: #{tpu_custom_call.1} parent=5 // pred_fallthru
        _
      %p222 = scmp.lt.s32.totalorder %s18, 5
      // Predicated region
      $region29: #{tpu_custom_call.1} parent=5 // pred_check
        %p223 = pneg %p222
      $region30: #{tpu_custom_call.1} parent=5 // pred_check_branch
        %225 = sbr.rel (%p223) target = $region32
      $region31: #{tpu_custom_call.1} parent=5 // pred_region
        // Predicated region
        $region33: #{tpu_custom_call.1} parent=31 // pred_check
          %p226 = pneg %p59
        $region34: #{tpu_custom_call.1} parent=31 // pred_check_branch
          %228 = sbr.rel (%p226) target = $region36
        $region35: #{tpu_custom_call.1} parent=31 // pred_region
          %s229 = sand.u32 %s18, 1
          %s230 = scalar_lea.sflag [#allocation8], %s229
          %s231 = sand.u32 %s49, 1
          %s232 = smul.addr %s231, 128
          %s233 = scalar_lea.vmem [#allocation7], %s232
          %s235 = ssub.s32 2048, 2048
          %236 = vsyncadd %s230, %s235
          %s237 = smul.addr %s18, 32
          %s238 = smul.addr %s237, 64
          %s239 = scalar_lea.hbm %s2, %s238
          %s240 = sshll.u32 %s233, 4
          %s241 = int_to_ptr.vmem [resolvable:$true] %s240
          %246 = dma.hbm_to_vmem [thread:$0]  %s239, 2048, %s241, %s230, 64, 64, 4
        $region36: #{tpu_custom_call.1} parent=31 // pred_fallthru
          _
        // Predicated region
        $region37: #{tpu_custom_call.1} parent=31 // pred_check
          %p247 = pneg %p85
        $region38: #{tpu_custom_call.1} parent=31 // pred_check_branch
          %249 = sbr.rel (%p247) target = $region40
        $region39: #{tpu_custom_call.1} parent=31 // pred_region
          %p250 = scmp.lt.s32.totalorder %s18, 4
          %s251 = scalar_select %p250, %s18, 4
          %s252 = scalar_lea.vmem %s3, %s251
        $region40: #{tpu_custom_call.1} parent=31 // pred_fallthru
          _
      $region32: #{tpu_custom_call.1} parent=5 // pred_fallthru
        _
      %p253 = scmp.le.s32.totalorder 1, %s18
      %p254 = scmp.lt.s32.totalorder %s18, 6
      %p255 = pnand %p253, %p254
      %p256 = pneg %p255
      // Predicated region
      $region41: #{tpu_custom_call.1} parent=5 // pred_check
        _
      $region42: #{tpu_custom_call.1} parent=5 // pred_check_branch
        %258 = sbr.rel (%p255) target = $region44
      $region43: #{tpu_custom_call.1} parent=5 // pred_region
        %s259 = ssub.s32 %s18, 1
        // Predicated region
        $region45: #{tpu_custom_call.1} parent=43 // pred_check
          %p260 = pneg %p39
        $region46: #{tpu_custom_call.1} parent=43 // pred_check_branch
          %262 = sbr.rel (%p260) target = $region48
        $region47: #{tpu_custom_call.1} parent=43 // pred_region
          %263 = dma.done [#allocation5], 1024
        $region48: #{tpu_custom_call.1} parent=43 // pred_fallthru
          _
        %s264 = sand.u32 %s23, 1
        %s265 = scalar_lea.sflag [#allocation8], %s264
        %s266 = sand.u32 %s52, 1
        %s267 = smul.addr %s266, 128
        %s268 = scalar_lea.vmem [#allocation7], %s267
        // Predicated region
        $region49: #{tpu_custom_call.1} parent=43 // pred_check
          %p269 = pneg %p65
        $region50: #{tpu_custom_call.1} parent=43 // pred_check_branch
          %271 = sbr.rel (%p269) target = $region52
        $region51: #{tpu_custom_call.1} parent=43 // pred_region
          %272 = dma.done %s265, 2048
        $region52: #{tpu_custom_call.1} parent=43 // pred_fallthru
          _
        // Predicated region
        $region53: #{tpu_custom_call.1} parent=43 // pred_check
          %p273 = pneg %p133
        $region54: #{tpu_custom_call.1} parent=43 // pred_check_branch
          %275 = sbr.rel (%p273) target = $region56
        $region55: #{tpu_custom_call.1} parent=43 // pred_region
          %276 = dma.done [#allocation8], 1024
        $region56: #{tpu_custom_call.1} parent=43 // pred_fallthru
          _
        %p277 = pneg %p39
        %p278 = pneg %p36
        %s279 = sand.u32 %s23, 1
        %s280 = scalar_lea.sflag [#allocation8], %s279
        %s281 = sand.u32 %s52, 1
        %s282 = smul.addr %s281, 128
        %s283 = scalar_lea.vmem [#allocation7], %s282
        %p284 = pneg %p65
        %p285 = pneg %p62
        %p286 = scmp.lt.s32.totalorder %s23, 4
        %s287 = scalar_select %p286, %s23, 4
        %s288 = scalar_lea.vmem %s3, %s287
        %p289 = pneg %p91
        %p290 = pneg %p88
        %p291 = pneg %p112
        %p292 = pneg %p109
        %p293 = pneg %p133
        %p294 = pneg %p130
        %p295 = pneg %p154
        %p296 = pneg %p151
        %p297 = pneg %p175
        %p298 = pneg %p172
        %p299 = scmp.lt.s32.totalorder %s23, 4
        %s300 = scalar_select %p299, %s23, 4
        %s301 = scalar_lea.vmem %s3, %s300
        %p303 = scmp.eq.s32.totalorder %s23, 0
        // Predicated region
        $region57: #{tpu_custom_call.1} parent=43 // pred_check
          %p304 = pneg %p303
        $region58: #{tpu_custom_call.1} parent=43 // pred_check_branch
          %306 = sbr.rel (%p304) target = $region60
        $region59: #{tpu_custom_call.1} parent=43 // pred_region
          // Predicated region
          $region61: #{tpu_custom_call.1} parent=59 // pred_check
            _
          $region62: #{tpu_custom_call.1} parent=59 // pred_check_branch
            %308 = sbr.rel target = $region64
          $region63: #{tpu_custom_call.1} parent=59 // pred_region
            %309 = sst [smem:[#allocation13]] [#allocation12]
            %310 = sst [smem:[#allocation14]] [#allocation11]
          $region64: #{tpu_custom_call.1} parent=59 // pred_fallthru
            _
          %312 = shalt.err (0)
          %s314 = sshll.u32 [#allocation2], 4
          %s315 = int_to_ptr.vmem [resolvable:$true] %s314
          %317 = dma.hbm_to_vmem [thread:$0]  %s1, 1024, %s315, [#allocation3]
          %s318 = smul.u32 4, 16
          %s319 = smul.u32 %s318, 1
          %s320 = sshll.u32 %s319, 4
          %321 = dma.done [#allocation3], %s320
        $region60: #{tpu_custom_call.1} parent=43 // pred_fallthru
          _
        %v322 = vld [vmem:[#allocation2] sm:$0xff]
        %v323 = vld [vmem:[#allocation2 + $0x8] sm:$0xff]
        %v324 = vld [vmem:[#allocation2 + $0x10] sm:$0xff]
        %v325 = vld [vmem:[#allocation2 + $0x18] sm:$0xff]
        %v326 = vld [vmem:[#allocation2 + $0x20] sm:$0xff]
        %v327 = vld [vmem:[#allocation2 + $0x28] sm:$0xff]
        %v328 = vld [vmem:[#allocation2 + $0x30] sm:$0xff]
        %v329 = vld [vmem:[#allocation2 + $0x38] sm:$0xff]
        %v330 = vld [vmem:[#allocation4] sm:$0xf]
        %v331 = vld [vmem:[#allocation4 + $0x4] sm:$0xf]
        %v332 = vld [vmem:[#allocation4 + $0x8] sm:$0xf]
        %v333 = vld [vmem:[#allocation4 + $0xc] sm:$0xf]
        %v334 = vld [vmem:[#allocation4 + $0x10] sm:$0xf]
        %v335 = vld [vmem:[#allocation4 + $0x14] sm:$0xf]
        %v336 = vld [vmem:[#allocation4 + $0x18] sm:$0xf]
        %v337 = vld [vmem:[#allocation4 + $0x1c] sm:$0xf]
        %v338 = vld [vmem:[#allocation4 + $0x20] sm:$0xf]
        %v339 = vld [vmem:[#allocation4 + $0x24] sm:$0xf]
        %v340 = vld [vmem:[#allocation4 + $0x28] sm:$0xf]
        %v341 = vld [vmem:[#allocation4 + $0x2c] sm:$0xf]
        %v342 = vld [vmem:[#allocation4 + $0x30] sm:$0xf]
        %v343 = vld [vmem:[#allocation4 + $0x34] sm:$0xf]
        %v344 = vld [vmem:[#allocation4 + $0x38] sm:$0xf]
        %v345 = vld [vmem:[#allocation4 + $0x3c] sm:$0xf]
        %v362 = vunpack.c.l.b16 %v330
        %v363 = vunpack.c.l.b16 %v331
        %v364 = vunpack.c.l.b16 %v332
        %v365 = vunpack.c.l.b16 %v333
        %v366 = vunpack.c.l.b16 %v334
        %v367 = vunpack.c.l.b16 %v335
        %v368 = vunpack.c.l.b16 %v336
        %v369 = vunpack.c.l.b16 %v337
        %v370 = vunpack.c.l.b16 %v338
        %v371 = vunpack.c.l.b16 %v339
        %v372 = vunpack.c.l.b16 %v340
        %v373 = vunpack.c.l.b16 %v341
        %v374 = vunpack.c.l.b16 %v342
        %v375 = vunpack.c.l.b16 %v343
        %v376 = vunpack.c.l.b16 %v344
        %v377 = vunpack.c.l.b16 %v345
        %v378 = vpack.c.b16 %v363, %v362
        %v379 = vpack.c.b16 %v365, %v364
        %v380 = vpack.c.b16 %v367, %v366
        %v381 = vpack.c.b16 %v369, %v368
        %v382 = vpack.c.b16 %v371, %v370
        %v383 = vpack.c.b16 %v373, %v372
        %v384 = vpack.c.b16 %v375, %v374
        %v385 = vpack.c.b16 %v377, %v376
        %394 = vmatprep.subr.bf16.mxu0 0
        %395 = vmatpush1.bf16.msra.mxu0 %v322
        %396 = vmatprep.subr.bf16.mxu0 0
        %397 = vmatpush1.bf16.msra.mxu0 %v323
        %398 = vmatprep.subr.bf16.mxu0 0
        %399 = vmatpush1.bf16.msra.mxu0 %v324
        %400 = vmatprep.subr.bf16.mxu0 0
        %401 = vmatpush1.bf16.msra.mxu0 %v325
        %402 = vmatprep.subr.bf16.mxu0 0
        %403 = vmatpush1.bf16.msra.mxu0 %v326
        %404 = vmatprep.subr.bf16.mxu0 0
        %405 = vmatpush1.bf16.msra.mxu0 %v327
        %406 = vmatprep.subr.bf16.mxu0 0
        %407 = vmatpush1.bf16.msra.mxu0 %v328
        %408 = vmatprep.subr.bf16.mxu0 0
        %409 = vmatpush1.bf16.msra.mxu0 %v329
        %410 = vmatprep.subr.bf16.mxu0 0
        %411 = vmatpush1.bf16.msra.mxu0 0
        %412 = vmatprep.subr.bf16.mxu0 0
        %413 = vmatpush1.bf16.msra.mxu0 0
        %414 = vmatprep.subr.bf16.mxu0 0
        %415 = vmatpush1.bf16.msra.mxu0 0
        %416 = vmatprep.subr.bf16.mxu0 0
        %417 = vmatpush1.bf16.msra.mxu0 0
        %418 = vmatprep.subr.bf16.mxu0 0
        %419 = vmatpush1.bf16.msra.mxu0 0
        %420 = vmatprep.subr.bf16.mxu0 0
        %421 = vmatpush1.bf16.msra.mxu0 0
        %422 = vmatprep.subr.bf16.mxu0 0
        %423 = vmatpush1.bf16.msra.mxu0 0
        %424 = vmatprep.subr.bf16.mxu0 0
        %425 = vmatpush1.bf16.msra.mxu0 0
        %426 = vmatprep.mubr.bf16.mxu0 0
        %427 = vmatmul.mubr.bf16.gmra.mrb[0].mxu0 %v378
        %v428 = vpop.f32.mrb[0].mxu0
        %v429 = vadd.f32 0.0, %v428
        %v430 = vpop.f32.mrb[0].mxu0
        %v431 = vpop.f32.mrb[0].mxu0
        %v432 = vadd.f32 0.0, %v431
        %v433 = vpop.f32.mrb[0].mxu0
        %434 = vmatprep.mubr.bf16.mxu0 0
        %435 = vmatmul.mubr.bf16.gmra.mrb[0].mxu0 %v379
        %v436 = vpop.f32.mrb[0].mxu0
        %v437 = vadd.f32 0.0, %v436
        %v438 = vpop.f32.mrb[0].mxu0
        %v439 = vpop.f32.mrb[0].mxu0
        %v440 = vadd.f32 0.0, %v439
        %v441 = vpop.f32.mrb[0].mxu0
        %442 = vmatprep.mubr.bf16.mxu0 0
        %443 = vmatmul.mubr.bf16.gmra.mrb[0].mxu0 %v380
        %v444 = vpop.f32.mrb[0].mxu0
        %v445 = vadd.f32 0.0, %v444
        %v446 = vpop.f32.mrb[0].mxu0
        %v447 = vpop.f32.mrb[0].mxu0
        %v448 = vadd.f32 0.0, %v447
        %v449 = vpop.f32.mrb[0].mxu0
        %450 = vmatprep.mubr.bf16.mxu0 0
        %451 = vmatmul.mubr.bf16.gmra.mrb[0].mxu0 %v381
        %v452 = vpop.f32.mrb[0].mxu0
        %v453 = vadd.f32 0.0, %v452
        %v454 = vpop.f32.mrb[0].mxu0
        %v455 = vpop.f32.mrb[0].mxu0
        %v456 = vadd.f32 0.0, %v455
        %v457 = vpop.f32.mrb[0].mxu0
        %458 = vmatprep.mubr.bf16.mxu0 0
        %459 = vmatmul.mubr.bf16.gmra.mrb[0].mxu0 %v382
        %v460 = vpop.f32.mrb[0].mxu0
        %v461 = vadd.f32 0.0, %v460
        %v462 = vpop.f32.mrb[0].mxu0
        %v463 = vpop.f32.mrb[0].mxu0
        %v464 = vadd.f32 0.0, %v463
        %v465 = vpop.f32.mrb[0].mxu0
        %466 = vmatprep.mubr.bf16.mxu0 0
        %467 = vmatmul.mubr.bf16.gmra.mrb[0].mxu0 %v383
        %v468 = vpop.f32.mrb[0].mxu0
        %v469 = vadd.f32 0.0, %v468
        %v470 = vpop.f32.mrb[0].mxu0
        %v471 = vpop.f32.mrb[0].mxu0
        %v472 = vadd.f32 0.0, %v471
        %v473 = vpop.f32.mrb[0].mxu0
        %474 = vmatprep.mubr.bf16.mxu0 0
        %475 = vmatmul.mubr.bf16.gmra.mrb[0].mxu0 %v384
        %v476 = vpop.f32.mrb[0].mxu0
        %v477 = vadd.f32 0.0, %v476
        %v478 = vpop.f32.mrb[0].mxu0
        %v479 = vpop.f32.mrb[0].mxu0
        %v480 = vadd.f32 0.0, %v479
        %v481 = vpop.f32.mrb[0].mxu0
        %482 = vmatprep.mubr.bf16.mxu0 0
        %483 = vmatmul.mubr.bf16.gmra.mrb[0].mxu0 %v385
        %v484 = vpop.f32.mrb[0].mxu0
        %v485 = vadd.f32 0.0, %v484
        %v486 = vpop.f32.mrb[0].mxu0
        %v487 = vpop.f32.mrb[0].mxu0
        %v488 = vadd.f32 0.0, %v487
        %v489 = vpop.f32.mrb[0].mxu0
        %490 = vdwg.mxu0
        %v491 = vpack.c.bf16 %v432, %v429
        %v492 = vpack.c.bf16 %v440, %v437
        %v493 = vpack.c.bf16 %v448, %v445
        %v494 = vpack.c.bf16 %v456, %v453
        %v495 = vpack.c.bf16 %v464, %v461
        %v496 = vpack.c.bf16 %v472, %v469
        %v497 = vpack.c.bf16 %v480, %v477
        %v498 = vpack.c.bf16 %v488, %v485
        %v499 = vld [vmem:[%s268] sm:$0xf]
        %v500 = vld [vmem:[%s268 + $0x4] sm:$0xf]
        %v501 = vld [vmem:[%s268 + $0x8] sm:$0xf]
        %v502 = vld [vmem:[%s268 + $0xc] sm:$0xf]
        %v503 = vld [vmem:[%s268 + $0x10] sm:$0xf]
        %v504 = vld [vmem:[%s268 + $0x14] sm:$0xf]
        %v505 = vld [vmem:[%s268 + $0x18] sm:$0xf]
        %v506 = vld [vmem:[%s268 + $0x1c] sm:$0xf]
        %v507 = vld [vmem:[%s268 + $0x20] sm:$0xf]
        %v508 = vld [vmem:[%s268 + $0x24] sm:$0xf]
        %v509 = vld [vmem:[%s268 + $0x28] sm:$0xf]
        %v510 = vld [vmem:[%s268 + $0x2c] sm:$0xf]
        %v511 = vld [vmem:[%s268 + $0x30] sm:$0xf]
        %v512 = vld [vmem:[%s268 + $0x34] sm:$0xf]
        %v513 = vld [vmem:[%s268 + $0x38] sm:$0xf]
        %v514 = vld [vmem:[%s268 + $0x3c] sm:$0xf]
        %v515 = vld [vmem:[%s268 + $0x40] sm:$0xf]
        %v516 = vld [vmem:[%s268 + $0x44] sm:$0xf]
        %v517 = vld [vmem:[%s268 + $0x48] sm:$0xf]
        %v518 = vld [vmem:[%s268 + $0x4c] sm:$0xf]
        %v519 = vld [vmem:[%s268 + $0x50] sm:$0xf]
        %v520 = vld [vmem:[%s268 + $0x54] sm:$0xf]
        %v521 = vld [vmem:[%s268 + $0x58] sm:$0xf]
        %v522 = vld [vmem:[%s268 + $0x5c] sm:$0xf]
        %v523 = vld [vmem:[%s268 + $0x60] sm:$0xf]
        %v524 = vld [vmem:[%s268 + $0x64] sm:$0xf]
        %v525 = vld [vmem:[%s268 + $0x68] sm:$0xf]
        %v526 = vld [vmem:[%s268 + $0x6c] sm:$0xf]
        %v527 = vld [vmem:[%s268 + $0x70] sm:$0xf]
        %v528 = vld [vmem:[%s268 + $0x74] sm:$0xf]
        %v529 = vld [vmem:[%s268 + $0x78] sm:$0xf]
        %v530 = vld [vmem:[%s268 + $0x7c] sm:$0xf]
        %v547 = vunpack.c.l.b16 %v515
        %v548 = vunpack.c.l.b16 %v516
        %v549 = vunpack.c.l.b16 %v517
        %v550 = vunpack.c.l.b16 %v518
        %v551 = vunpack.c.l.b16 %v519
        %v552 = vunpack.c.l.b16 %v520
        %v553 = vunpack.c.l.b16 %v521
        %v554 = vunpack.c.l.b16 %v522
        %v555 = vunpack.c.l.b16 %v523
        %v556 = vunpack.c.l.b16 %v524
        %v557 = vunpack.c.l.b16 %v525
        %v558 = vunpack.c.l.b16 %v526
        %v559 = vunpack.c.l.b16 %v527
        %v560 = vunpack.c.l.b16 %v528
        %v561 = vunpack.c.l.b16 %v529
        %v562 = vunpack.c.l.b16 %v530
        %v563 = vpack.c.b16 %v548, %v547
        %v564 = vpack.c.b16 %v550, %v549
        %v565 = vpack.c.b16 %v552, %v551
        %v566 = vpack.c.b16 %v554, %v553
        %v567 = vpack.c.b16 %v556, %v555
        %v568 = vpack.c.b16 %v558, %v557
        %v569 = vpack.c.b16 %v560, %v559
        %v570 = vpack.c.b16 %v562, %v561
        %579 = vmatprep.subr.bf16.mxu0 0
        %580 = vmatpush1.bf16.msra.mxu0 %v563
        %581 = vmatprep.subr.bf16.mxu0 0
        %582 = vmatpush1.bf16.msra.mxu0 %v564
        %583 = vmatprep.subr.bf16.mxu0 0
        %584 = vmatpush1.bf16.msra.mxu0 %v565
        %585 = vmatprep.subr.bf16.mxu0 0
        %586 = vmatpush1.bf16.msra.mxu0 %v566
        %587 = vmatprep.subr.bf16.mxu0 0
        %588 = vmatpush1.bf16.msra.mxu0 %v567
        %589 = vmatprep.subr.bf16.mxu0 0
        %590 = vmatpush1.bf16.msra.mxu0 %v568
        %591 = vmatprep.subr.bf16.mxu0 0
        %592 = vmatpush1.bf16.msra.mxu0 %v569
        %593 = vmatprep.subr.bf16.mxu0 0
        %594 = vmatpush1.bf16.msra.mxu0 %v570
        %595 = vmatprep.subr.bf16.mxu0 0
        %596 = vmatpush1.bf16.msra.mxu0 0
        %597 = vmatprep.subr.bf16.mxu0 0
        %598 = vmatpush1.bf16.msra.mxu0 0
        %599 = vmatprep.subr.bf16.mxu0 0
        %600 = vmatpush1.bf16.msra.mxu0 0
        %601 = vmatprep.subr.bf16.mxu0 0
        %602 = vmatpush1.bf16.msra.mxu0 0
        %603 = vmatprep.subr.bf16.mxu0 0
        %604 = vmatpush1.bf16.msra.mxu0 0
        %605 = vmatprep.subr.bf16.mxu0 0
        %606 = vmatpush1.bf16.msra.mxu0 0
        %607 = vmatprep.subr.bf16.mxu0 0
        %608 = vmatpush1.bf16.msra.mxu0 0
        %609 = vmatprep.subr.bf16.mxu0 0
        %610 = vmatpush1.bf16.msra.mxu0 0
        %611 = vmatprep.mubr.bf16.mxu0 0
        %612 = vmatmul.mubr.bf16.gmra.mrb[0].mxu0 %v322
        %v613 = vpop.f32.mrb[0].mxu0
        %v614 = vadd.f32 0.0, %v613
        %v615 = vpop.f32.mrb[0].mxu0
        %v616 = vpop.f32.mrb[0].mxu0
        %v617 = vadd.f32 0.0, %v616
        %v618 = vpop.f32.mrb[0].mxu0
        %619 = vmatprep.mubr.bf16.mxu0 0
        %620 = vmatmul.mubr.bf16.gmra.mrb[0].mxu0 %v323
        %v621 = vpop.f32.mrb[0].mxu0
        %v622 = vadd.f32 0.0, %v621
        %v623 = vpop.f32.mrb[0].mxu0
        %v624 = vpop.f32.mrb[0].mxu0
        %v625 = vadd.f32 0.0, %v624
        %v626 = vpop.f32.mrb[0].mxu0
        %627 = vmatprep.mubr.bf16.mxu0 0
        %628 = vmatmul.mubr.bf16.gmra.mrb[0].mxu0 %v324
        %v629 = vpop.f32.mrb[0].mxu0
        %v630 = vadd.f32 0.0, %v629
        %v631 = vpop.f32.mrb[0].mxu0
        %v632 = vpop.f32.mrb[0].mxu0
        %v633 = vadd.f32 0.0, %v632
        %v634 = vpop.f32.mrb[0].mxu0
        %635 = vmatprep.mubr.bf16.mxu0 0
        %636 = vmatmul.mubr.bf16.gmra.mrb[0].mxu0 %v325
        %v637 = vpop.f32.mrb[0].mxu0
        %v638 = vadd.f32 0.0, %v637
        %v639 = vpop.f32.mrb[0].mxu0
        %v640 = vpop.f32.mrb[0].mxu0
        %v641 = vadd.f32 0.0, %v640
        %v642 = vpop.f32.mrb[0].mxu0
        %643 = vmatprep.mubr.bf16.mxu0 0
        %644 = vmatmul.mubr.bf16.gmra.mrb[0].mxu0 %v326
        %v645 = vpop.f32.mrb[0].mxu0
        %v646 = vadd.f32 0.0, %v645
        %v647 = vpop.f32.mrb[0].mxu0
        %v648 = vpop.f32.mrb[0].mxu0
        %v649 = vadd.f32 0.0, %v648
        %v650 = vpop.f32.mrb[0].mxu0
        %651 = vmatprep.mubr.bf16.mxu0 0
        %652 = vmatmul.mubr.bf16.gmra.mrb[0].mxu0 %v327
        %v653 = vpop.f32.mrb[0].mxu0
        %v654 = vadd.f32 0.0, %v653
        %v655 = vpop.f32.mrb[0].mxu0
        %v656 = vpop.f32.mrb[0].mxu0
        %v657 = vadd.f32 0.0, %v656
        %v658 = vpop.f32.mrb[0].mxu0
        %659 = vmatprep.mubr.bf16.mxu0 0
        %660 = vmatmul.mubr.bf16.gmra.mrb[0].mxu0 %v328
        %v661 = vpop.f32.mrb[0].mxu0
        %v662 = vadd.f32 0.0, %v661
        %v663 = vpop.f32.mrb[0].mxu0
        %v664 = vpop.f32.mrb[0].mxu0
        %v665 = vadd.f32 0.0, %v664
        %v666 = vpop.f32.mrb[0].mxu0
        %667 = vmatprep.mubr.bf16.mxu0 0
        %668 = vmatmul.mubr.bf16.gmra.mrb[0].mxu0 %v329
        %v669 = vpop.f32.mrb[0].mxu0
        %v670 = vadd.f32 0.0, %v669
        %v671 = vpop.f32.mrb[0].mxu0
        %v672 = vpop.f32.mrb[0].mxu0
        %v673 = vadd.f32 0.0, %v672
        %v674 = vpop.f32.mrb[0].mxu0
        %675 = vdwg.mxu0
        %v692 = vunpack.c.l.b16 %v499
        %v693 = vunpack.c.l.b16 %v500
        %v694 = vunpack.c.l.b16 %v501
        %v695 = vunpack.c.l.b16 %v502
        %v696 = vunpack.c.l.b16 %v503
        %v697 = vunpack.c.l.b16 %v504
        %v698 = vunpack.c.l.b16 %v505
        %v699 = vunpack.c.l.b16 %v506
        %v700 = vunpack.c.l.b16 %v507
        %v701 = vunpack.c.l.b16 %v508
        %v702 = vunpack.c.l.b16 %v509
        %v703 = vunpack.c.l.b16 %v510
        %v704 = vunpack.c.l.b16 %v511
        %v705 = vunpack.c.l.b16 %v512
        %v706 = vunpack.c.l.b16 %v513
        %v707 = vunpack.c.l.b16 %v514
        %v708 = vpack.c.b16 %v693, %v692
        %v709 = vpack.c.b16 %v695, %v694
        %v710 = vpack.c.b16 %v697, %v696
        %v711 = vpack.c.b16 %v699, %v698
        %v712 = vpack.c.b16 %v701, %v700
        %v713 = vpack.c.b16 %v703, %v702
        %v714 = vpack.c.b16 %v705, %v704
        %v715 = vpack.c.b16 %v707, %v706
        %724 = vmatprep.subr.bf16.mxu0 0
        %725 = vmatpush1.bf16.msra.mxu0 %v708
        %726 = vmatprep.subr.bf16.mxu0 0
        %727 = vmatpush1.bf16.msra.mxu0 %v709
        %728 = vmatprep.subr.bf16.mxu0 0
        %729 = vmatpush1.bf16.msra.mxu0 %v710
        %730 = vmatprep.subr.bf16.mxu0 0
        %731 = vmatpush1.bf16.msra.mxu0 %v711
        %732 = vmatprep.subr.bf16.mxu0 0
        %733 = vmatpush1.bf16.msra.mxu0 %v712
        %734 = vmatprep.subr.bf16.mxu0 0
        %735 = vmatpush1.bf16.msra.mxu0 %v713
        %736 = vmatprep.subr.bf16.mxu0 0
        %737 = vmatpush1.bf16.msra.mxu0 %v714
        %738 = vmatprep.subr.bf16.mxu0 0
        %739 = vmatpush1.bf16.msra.mxu0 %v715
        %740 = vmatprep.subr.bf16.mxu0 0
        %741 = vmatpush1.bf16.msra.mxu0 0
        %742 = vmatprep.subr.bf16.mxu0 0
        %743 = vmatpush1.bf16.msra.mxu0 0
        %744 = vmatprep.subr.bf16.mxu0 0
        %745 = vmatpush1.bf16.msra.mxu0 0
        %746 = vmatprep.subr.bf16.mxu0 0
        %747 = vmatpush1.bf16.msra.mxu0 0
        %748 = vmatprep.subr.bf16.mxu0 0
        %749 = vmatpush1.bf16.msra.mxu0 0
        %750 = vmatprep.subr.bf16.mxu0 0
        %751 = vmatpush1.bf16.msra.mxu0 0
        %752 = vmatprep.subr.bf16.mxu0 0
        %753 = vmatpush1.bf16.msra.mxu0 0
        %754 = vmatprep.subr.bf16.mxu0 0
        %755 = vmatpush1.bf16.msra.mxu0 0
        %756 = vmatprep.mubr.bf16.mxu0 0
        %757 = vmatmul.mubr.bf16.gmra.mrb[0].mxu0 %v491
        %v758 = vpop.f32.mrb[0].mxu0
        %v759 = vadd.f32 %v614, %v758
        %v760 = vpop.f32.mrb[0].mxu0
        %v761 = vpop.f32.mrb[0].mxu0
        %v762 = vadd.f32 %v617, %v761
        %v763 = vpop.f32.mrb[0].mxu0
        %764 = vmatprep.mubr.bf16.mxu0 0
        %765 = vmatmul.mubr.bf16.gmra.mrb[0].mxu0 %v492
        %v766 = vpop.f32.mrb[0].mxu0
        %v767 = vadd.f32 %v622, %v766
        %v768 = vpop.f32.mrb[0].mxu0
        %v769 = vpop.f32.mrb[0].mxu0
        %v770 = vadd.f32 %v625, %v769
        %v771 = vpop.f32.mrb[0].mxu0
        %772 = vmatprep.mubr.bf16.mxu0 0
        %773 = vmatmul.mubr.bf16.gmra.mrb[0].mxu0 %v493
        %v774 = vpop.f32.mrb[0].mxu0
        %v775 = vadd.f32 %v630, %v774
        %v776 = vpop.f32.mrb[0].mxu0
        %v777 = vpop.f32.mrb[0].mxu0
        %v778 = vadd.f32 %v633, %v777
        %v779 = vpop.f32.mrb[0].mxu0
        %780 = vmatprep.mubr.bf16.mxu0 0
        %781 = vmatmul.mubr.bf16.gmra.mrb[0].mxu0 %v494
        %v782 = vpop.f32.mrb[0].mxu0
        %v783 = vadd.f32 %v638, %v782
        %v784 = vpop.f32.mrb[0].mxu0
        %v785 = vpop.f32.mrb[0].mxu0
        %v786 = vadd.f32 %v641, %v785
        %v787 = vpop.f32.mrb[0].mxu0
        %788 = vmatprep.mubr.bf16.mxu0 0
        %789 = vmatmul.mubr.bf16.gmra.mrb[0].mxu0 %v495
        %v790 = vpop.f32.mrb[0].mxu0
        %v791 = vadd.f32 %v646, %v790
        %v792 = vpop.f32.mrb[0].mxu0
        %v793 = vpop.f32.mrb[0].mxu0
        %v794 = vadd.f32 %v649, %v793
        %v795 = vpop.f32.mrb[0].mxu0
        %796 = vmatprep.mubr.bf16.mxu0 0
        %797 = vmatmul.mubr.bf16.gmra.mrb[0].mxu0 %v496
        %v798 = vpop.f32.mrb[0].mxu0
        %v799 = vadd.f32 %v654, %v798
        %v800 = vpop.f32.mrb[0].mxu0
        %v801 = vpop.f32.mrb[0].mxu0
        %v802 = vadd.f32 %v657, %v801
        %v803 = vpop.f32.mrb[0].mxu0
        %804 = vmatprep.mubr.bf16.mxu0 0
        %805 = vmatmul.mubr.bf16.gmra.mrb[0].mxu0 %v497
        %v806 = vpop.f32.mrb[0].mxu0
        %v807 = vadd.f32 %v662, %v806
        %v808 = vpop.f32.mrb[0].mxu0
        %v809 = vpop.f32.mrb[0].mxu0
        %v810 = vadd.f32 %v665, %v809
        %v811 = vpop.f32.mrb[0].mxu0
        %812 = vmatprep.mubr.bf16.mxu0 0
        %813 = vmatmul.mubr.bf16.gmra.mrb[0].mxu0 %v498
        %v814 = vpop.f32.mrb[0].mxu0
        %v815 = vadd.f32 %v670, %v814
        %v816 = vpop.f32.mrb[0].mxu0
        %v817 = vpop.f32.mrb[0].mxu0
        %v818 = vadd.f32 %v673, %v817
        %v819 = vpop.f32.mrb[0].mxu0
        %820 = vdwg.mxu0
        %v821 = vld [vmem:[%s301] sm:$0x1]
        %v823 = vlaneseq
        %v824 = vshrl.u32 %v823, 7
        %v825 = vsub.s32 0, %v824
        %v826 = vrot.slane %v821, %v825
        %v828 = vadd.f32 %v759, %v826
        %v829 = vadd.f32 %v762, %v826
        %v830 = vadd.f32 %v767, %v826
        %v831 = vadd.f32 %v770, %v826
        %v832 = vadd.f32 %v775, %v826
        %v833 = vadd.f32 %v778, %v826
        %v834 = vadd.f32 %v783, %v826
        %v835 = vadd.f32 %v786, %v826
        %v836 = vadd.f32 %v791, %v826
        %v837 = vadd.f32 %v794, %v826
        %v838 = vadd.f32 %v799, %v826
        %v839 = vadd.f32 %v802, %v826
        %v840 = vadd.f32 %v807, %v826
        %v841 = vadd.f32 %v810, %v826
        %v842 = vadd.f32 %v815, %v826
        %v843 = vadd.f32 %v818, %v826
        %v844 = vmax.f32 %v828, 0.0
        %v845 = vmax.f32 %v829, 0.0
        %v846 = vmax.f32 %v830, 0.0
        %v847 = vmax.f32 %v831, 0.0
        %v848 = vmax.f32 %v832, 0.0
        %v849 = vmax.f32 %v833, 0.0
        %v850 = vmax.f32 %v834, 0.0
        %v851 = vmax.f32 %v835, 0.0
        %v852 = vmax.f32 %v836, 0.0
        %v853 = vmax.f32 %v837, 0.0
        %v854 = vmax.f32 %v838, 0.0
        %v855 = vmax.f32 %v839, 0.0
        %v856 = vmax.f32 %v840, 0.0
        %v857 = vmax.f32 %v841, 0.0
        %v858 = vmax.f32 %v842, 0.0
        %v859 = vmax.f32 %v843, 0.0
        %v860 = vpack.c.bf16 %v845, %v844
        %v861 = vpack.c.bf16 %v847, %v846
        %v862 = vpack.c.bf16 %v849, %v848
        %v863 = vpack.c.bf16 %v851, %v850
        %v864 = vpack.c.bf16 %v853, %v852
        %v865 = vpack.c.bf16 %v855, %v854
        %v866 = vpack.c.bf16 %v857, %v856
        %v867 = vpack.c.bf16 %v859, %v858
        %868 = vst [vmem:[#allocation2] sm:$0xff] %v860
        %869 = vst [vmem:[#allocation2 + $0x8] sm:$0xff] %v861
        %870 = vst [vmem:[#allocation2 + $0x10] sm:$0xff] %v862
        %871 = vst [vmem:[#allocation2 + $0x18] sm:$0xff] %v863
        %872 = vst [vmem:[#allocation2 + $0x20] sm:$0xff] %v864
        %873 = vst [vmem:[#allocation2 + $0x28] sm:$0xff] %v865
        %874 = vst [vmem:[#allocation2 + $0x30] sm:$0xff] %v866
        %875 = vst [vmem:[#allocation2 + $0x38] sm:$0xff] %v867
        %p876 = scmp.eq.s32.totalorder %s23, 4
        // Predicated region
        $region65: #{tpu_custom_call.1} parent=43 // pred_check
          %p877 = pneg %p876
        $region66: #{tpu_custom_call.1} parent=43 // pred_check_branch
          %879 = sbr.rel (%p877) target = $region68
        $region67: #{tpu_custom_call.1} parent=43 // pred_region
          %v880 = vld [vmem:[%s4] sm:$0xf]
          %881 = vmatprep.subr.bf16.mxu0 0
          %882 = vmatpush1.bf16.msra.mxu0 %v860
          %883 = vmatprep.subr.bf16.mxu0 0
          %884 = vmatpush1.bf16.msra.mxu0 %v861
          %885 = vmatprep.subr.bf16.mxu0 0
          %886 = vmatpush1.bf16.msra.mxu0 %v862
          %887 = vmatprep.subr.bf16.mxu0 0
          %888 = vmatpush1.bf16.msra.mxu0 %v863
          %889 = vmatprep.subr.bf16.mxu0 0
          %890 = vmatpush1.bf16.msra.mxu0 %v864
          %891 = vmatprep.subr.bf16.mxu0 0
          %892 = vmatpush1.bf16.msra.mxu0 %v865
          %893 = vmatprep.subr.bf16.mxu0 0
          %894 = vmatpush1.bf16.msra.mxu0 %v866
          %895 = vmatprep.subr.bf16.mxu0 0
          %896 = vmatpush1.bf16.msra.mxu0 %v867
          %897 = vmatprep.subr.bf16.mxu0 0
          %898 = vmatpush1.bf16.msra.mxu0 0
          %899 = vmatprep.subr.bf16.mxu0 0
          %900 = vmatpush1.bf16.msra.mxu0 0
          %901 = vmatprep.subr.bf16.mxu0 0
          %902 = vmatpush1.bf16.msra.mxu0 0
          %903 = vmatprep.subr.bf16.mxu0 0
          %904 = vmatpush1.bf16.msra.mxu0 0
          %905 = vmatprep.subr.bf16.mxu0 0
          %906 = vmatpush1.bf16.msra.mxu0 0
          %907 = vmatprep.subr.bf16.mxu0 0
          %908 = vmatpush1.bf16.msra.mxu0 0
          %909 = vmatprep.subr.bf16.mxu0 0
          %910 = vmatpush1.bf16.msra.mxu0 0
          %911 = vmatprep.subr.bf16.mxu0 0
          %912 = vmatpush1.bf16.msra.mxu0 0
          %913 = vmatprep.mubr.bf16.mxu0 0
          %914 = vmatmul.mubr.bf16.gmra.mrb[0].mxu0 %v880
          %v915 = vpop.f32.mrb[0].mxu0
          %v916 = vadd.f32 0.0, %v915
          %v917 = vpop.f32.mrb[0].mxu0
          %v918 = vpop.f32.mrb[0].mxu0
          %v919 = vpop.f32.mrb[0].mxu0
          %920 = vdwg.mxu0
          %v921 = vpack.c.bf16 %v916, %v916
          %v922 = vld [vmem:[#allocation9] sm:$0xf]
          %v923 = vld [vmem:[#allocation9 + $0x4] sm:$0xf]
          %v924 = vld [vmem:[#allocation9 + $0x8] sm:$0xf]
          %v925 = vld [vmem:[#allocation9 + $0xc] sm:$0xf]
          %v926 = vld [vmem:[#allocation9 + $0x10] sm:$0xf]
          %v927 = vld [vmem:[#allocation9 + $0x14] sm:$0xf]
          %v928 = vld [vmem:[#allocation9 + $0x18] sm:$0xf]
          %v929 = vld [vmem:[#allocation9 + $0x1c] sm:$0xf]
          %v930 = vld [vmem:[#allocation9 + $0x20] sm:$0xf]
          %v931 = vld [vmem:[#allocation9 + $0x24] sm:$0xf]
          %v932 = vld [vmem:[#allocation9 + $0x28] sm:$0xf]
          %v933 = vld [vmem:[#allocation9 + $0x2c] sm:$0xf]
          %v934 = vld [vmem:[#allocation9 + $0x30] sm:$0xf]
          %v935 = vld [vmem:[#allocation9 + $0x34] sm:$0xf]
          %v936 = vld [vmem:[#allocation9 + $0x38] sm:$0xf]
          %v937 = vld [vmem:[#allocation9 + $0x3c] sm:$0xf]
          %v938 = vld [vmem:[%s6] sm:$0x1]
          %v940 = vlaneseq
          %v941 = vshrl.u32 %v940, 7
          %v942 = vsub.s32 0, %v941
          %v943 = vrot.slane %v938, %v942
          %v961 = vunpack.c.l.b16 %v922
          %v962 = vunpack.c.l.b16 %v923
          %v963 = vunpack.c.l.b16 %v924
          %v964 = vunpack.c.l.b16 %v925
          %v965 = vunpack.c.l.b16 %v926
          %v966 = vunpack.c.l.b16 %v927
          %v967 = vunpack.c.l.b16 %v928
          %v968 = vunpack.c.l.b16 %v929
          %v969 = vunpack.c.l.b16 %v930
          %v970 = vunpack.c.l.b16 %v931
          %v971 = vunpack.c.l.b16 %v932
          %v972 = vunpack.c.l.b16 %v933
          %v973 = vunpack.c.l.b16 %v934
          %v974 = vunpack.c.l.b16 %v935
          %v975 = vunpack.c.l.b16 %v936
          %v976 = vunpack.c.l.b16 %v937
          %v977 = vpack.c.b16 %v962, %v961
          %v978 = vpack.c.b16 %v964, %v963
          %v979 = vpack.c.b16 %v966, %v965
          %v980 = vpack.c.b16 %v968, %v967
          %v981 = vpack.c.b16 %v970, %v969
          %v982 = vpack.c.b16 %v972, %v971
          %v983 = vpack.c.b16 %v974, %v973
          %v984 = vpack.c.b16 %v976, %v975
          %993 = vmatprep.subr.bf16.mxu0 0
          %994 = vmatpush1.bf16.msra.mxu0 %v977
          %995 = vmatprep.subr.bf16.mxu0 0
          %996 = vmatpush1.bf16.msra.mxu0 %v978
          %997 = vmatprep.subr.bf16.mxu0 0
          %998 = vmatpush1.bf16.msra.mxu0 %v979
          %999 = vmatprep.subr.bf16.mxu0 0
          %1000 = vmatpush1.bf16.msra.mxu0 %v980
          %1001 = vmatprep.subr.bf16.mxu0 0
          %1002 = vmatpush1.bf16.msra.mxu0 %v981
          %1003 = vmatprep.subr.bf16.mxu0 0
          %1004 = vmatpush1.bf16.msra.mxu0 %v982
          %1005 = vmatprep.subr.bf16.mxu0 0
          %1006 = vmatpush1.bf16.msra.mxu0 %v983
          %1007 = vmatprep.subr.bf16.mxu0 0
          %1008 = vmatpush1.bf16.msra.mxu0 %v984
          %1009 = vmatprep.subr.bf16.mxu0 0
          %1010 = vmatpush1.bf16.msra.mxu0 0
          %1011 = vmatprep.subr.bf16.mxu0 0
          %1012 = vmatpush1.bf16.msra.mxu0 0
          %1013 = vmatprep.subr.bf16.mxu0 0
          %1014 = vmatpush1.bf16.msra.mxu0 0
          %1015 = vmatprep.subr.bf16.mxu0 0
          %1016 = vmatpush1.bf16.msra.mxu0 0
          %1017 = vmatprep.subr.bf16.mxu0 0
          %1018 = vmatpush1.bf16.msra.mxu0 0
          %1019 = vmatprep.subr.bf16.mxu0 0
          %1020 = vmatpush1.bf16.msra.mxu0 0
          %1021 = vmatprep.subr.bf16.mxu0 0
          %1022 = vmatpush1.bf16.msra.mxu0 0
          %1023 = vmatprep.subr.bf16.mxu0 0
          %1024 = vmatpush1.bf16.msra.mxu0 0
          %1025 = vmatprep.mubr.bf16.mxu0 0
          %1026 = vmatmul.mubr.bf16.gmra.mrb[0].mxu0 %v921
          %v1027 = vpop.f32.mrb[0].mxu0
          %v1028 = vadd.f32 %v943, %v1027
          %v1029 = vpop.f32.mrb[0].mxu0
          %v1030 = vpop.f32.mrb[0].mxu0
          %v1031 = vpop.f32.mrb[0].mxu0
          %1032 = vdwg.mxu0
          %v1033 = vlaneseq
          %v1034 = vand.u32 %v1033, 127
          %vm1035 = vcmp.lt.s32.totalorder %v1034, 8
          %v1036 = vsel %vm1035, %v1028, -1e+30
          %1037 = vmax.xlane.f32.xlu0 %v1036
          %v1038 = vpop.xlane.xlu0 %1037
          %v1039 = vsub.f32 %v1036, %v1038
          %v1040 = vmul.f32 %v1039, 1.442695
          %v1041 = vpow.pop %v1040
          %1042 = vadd.xlane.f32.xlu0 %v1041
          %v1043 = vpop.xlane.xlu0 %1042
          %v1044 = vlog2.pop %v1043
          %v1045 = vmul.f32 %v1044, 0.6931472
          %v1046 = vsub.f32 %v1039, %v1045
          %1047 = vst [vmem:[#allocation10] sm:$0xff] %v1046
        $region68: #{tpu_custom_call.1} parent=43 // pred_fallthru
          _
        // Predicated region
        $region69: #{tpu_custom_call.1} parent=43 // pred_check
          %p1048 = pneg %p172
        $region70: #{tpu_custom_call.1} parent=43 // pred_check_branch
          %1050 = sbr.rel (%p1048) target = $region72
        $region71: #{tpu_custom_call.1} parent=43 // pred_region
          %s1052 = ssub.s32 128, 128
          %1053 = vsyncadd [#allocation6], %s1052
          %s1055 = sshll.u32 [#allocation10], 4
          %s1056 = int_to_ptr.vmem [resolvable:$true] %s1055
          %1058 = dma.vmem_to_hbm [thread:$0]  %s1056, 128, %s7, [#allocation6]
        $region72: #{tpu_custom_call.1} parent=43 // pred_fallthru
          _
        // Predicated region
        $region73: #{tpu_custom_call.1} parent=43 // pred_check
          %p1059 = pneg %p172
        $region74: #{tpu_custom_call.1} parent=43 // pred_check_branch
          %1061 = sbr.rel (%p1059) target = $region76
        $region75: #{tpu_custom_call.1} parent=43 // pred_region
          %1062 = dma.done [#allocation6], 128
        $region76: #{tpu_custom_call.1} parent=43 // pred_fallthru
          _
      $region44: #{tpu_custom_call.1} parent=5 // pred_fallthru
        _
      %p1063 = scmp.le.s32.totalorder 2, %s18
      // Predicated region
      $region77: #{tpu_custom_call.1} parent=5 // pred_check
        %p1064 = pneg %p1063
      $region78: #{tpu_custom_call.1} parent=5 // pred_check_branch
        %1066 = sbr.rel (%p1064) target = $region80
      $region79: #{tpu_custom_call.1} parent=5 // pred_region
        %s1067 = ssub.s32 %s18, 2
      $region80: #{tpu_custom_call.1} parent=5 // pred_fallthru
        _
    $region6: #{tpu_custom_call.1} parent=1 // loop_footer
      %s22 = sadd.s32 1, %s18
    $region7: #{tpu_custom_call.1} parent=1 // loop_footer_branch
      %17 = sbr.rel target = $region3
    $region8: #{tpu_custom_call.1} parent=1 // loop_exit
      _
    %1068 = vsyncpa [#allocation5], 1
    %s1069 = scalar_lea.sflag [#allocation5], 1
    %1070 = vsyncpa %s1069, 1
    %1071 = vsyncpa [#allocation8], 1
    %s1072 = scalar_lea.sflag [#allocation8], 1
    %1073 = vsyncpa %s1072, 1
    %1074 = vsyncpa [#allocation6], 1
    %s1075 = scalar_lea.sflag [#allocation6], 1
    %1076 = vsyncpa %s1075, 1
  %1077 = vsyncmov [#allocation3]
  %s1078 = vpop.sfrf %1077
  %p1079 = scmp.eq.s32.totalorder %s1078, 0
  %p1080 = pneg %p1079
  %1082 = shalt.err (%p1080)

</llo_original>
